<compile_context>
chip_gen: v7x
topology: tpu7x:2x2x1
jax: 0.10.0
libtpu: 0.0.40
codegen_flags: <defaults>
</compile_context>

<pallas_src>
import math

import jax
import jax.numpy as jnp
from jax.experimental import pallas as pl
from jax.experimental.pallas import tpu as pltpu

MNIST_STD = 0.3081

_LANES = 128                  # TPU vreg lane width
_MAX_SLABS_PER_TILE = 64      # 64 slabs * 49 rows * 128 lanes * 4 B ~= 1.5 MiB f32 / block
_SMALL_INPUT_BYTES = 1 << 20  # below this, fused XLA elementwise beats a kernel launch


def _normalize_kernel(x_ref, mean_scaled_ref, o_ref):
    # x_ref:           (slabs_per_tile, rows_per_slab, 128)  streaming image tile
    # mean_scaled_ref: (1, rows_per_slab, 128)               mean * (1/std), VMEM-resident
    # o_ref:           (slabs_per_tile, rows_per_slab, 128)
    # (x - mean) / std  ==  x * inv_std - mean * inv_std   (inv_std folded host-side)
    inv_std = jnp.float32(1.0 / MNIST_STD)
    x = x_ref[...].astype(jnp.float32)
    o_ref[...] = (x * inv_std - mean_scaled_ref[...]).astype(o_ref.dtype)


def normalize_mnist(image: jax.Array, mean: jax.Array, *, force_pallas: bool = False) -> jax.Array:
    """(image - mean) / MNIST_STD for NCHW image [B,C,H,W], per-pixel mean [...,H,W]."""
    B, C, H, W = image.shape
    assert mean.shape[-2:] == (H, W)
    P = H * W
    n_img = B * C
    itemsize = jnp.dtype(image.dtype).itemsize

    # Tiny inputs: kernel-launch + pipeline fixed costs dwarf the transfer.
    if not force_pallas and image.size * itemsize < _SMALL_INPUT_BYTES:
        mean_b = mean.reshape(1, 1, H, W).astype(jnp.float32)
        out = (image.astype(jnp.float32) - mean_b) * jnp.float32(1.0 / MNIST_STD)
        return out.astype(image.dtype)

    # Lane-dense layout: one "slab" = lcm(P, 128) elements = a whole number of
    # images AND a whole number of 128-lane rows.  MNIST: 8 images = 49 x 128.
    g = math.gcd(P, _LANES)
    imgs_per_slab = _LANES // g          # 8 for MNIST
    rows_per_slab = P // g               # 49 for MNIST

    # Pad only up to a whole slab (<= imgs_per_slab-1 dummy images, ~22 KiB max);
    # tiles never need padding because the partial last grid block is masked.
    n_slabs = pl.cdiv(n_img, imgs_per_slab)
    n_img_pad = n_slabs * imgs_per_slab
    x_flat = image.reshape(n_img, P)
    if n_img_pad != n_img:
        x_flat = jnp.pad(x_flat, ((0, n_img_pad - n_img), (0, 0)))
    x3d = x_flat.reshape(n_slabs, rows_per_slab, _LANES)

    # Mean pre-scaled by 1/std: exactly ONE slab (~24.5 KiB), constant-index
    # BlockSpec keeps it resident in VMEM; kernel broadcasts over the slab axis.
    mean_scaled = mean.reshape(-1).astype(jnp.float32) * jnp.float32(1.0 / MNIST_STD)
    mean_slab = jnp.tile(mean_scaled, imgs_per_slab).reshape(1, rows_per_slab, _LANES)

    # Tile sizing: as big as possible (amortize per-grid-step overhead against
    # the HBM roofline) but keep >= 2 grid steps so both v7x TensorCores get
    # work.  Leading block dim has no (8,128) constraint in this 3-D layout.
    slabs_per_tile = min(_MAX_SLABS_PER_TILE, n_slabs)
    if n_slabs >= 2:
        slabs_per_tile = min(slabs_per_tile, pl.cdiv(n_slabs, 2))
    grid = (pl.cdiv(n_slabs, slabs_per_tile),)

    n_elems = n_img_pad * P
    out3d = pl.pallas_call(
        _normalize_kernel,
        out_shape=jax.ShapeDtypeStruct((n_slabs, rows_per_slab, _LANES), image.dtype),
        grid=grid,
        in_specs=[
            # Streaming x tiles: double-buffered by the Pallas pipeline.
            pl.BlockSpec((slabs_per_tile, rows_per_slab, _LANES), lambda i: (i, 0, 0)),
            # Constant block index -> one-slab mean stays resident in VMEM.
            pl.BlockSpec((1, rows_per_slab, _LANES), lambda i: (0, 0, 0)),
        ],
        out_specs=pl.BlockSpec((slabs_per_tile, rows_per_slab, _LANES), lambda i: (i, 0, 0)),
        compiler_params=pltpu.CompilerParams(
            # Shard tiles across both TensorCores on v7x; no-op on v5e/v6e.
            dimension_semantics=("parallel",),
        ),
        cost_estimate=pl.CostEstimate(
            flops=2 * n_elems,
            transcendentals=0,
            bytes_accessed=2 * n_elems * itemsize + rows_per_slab * _LANES * 4,
        ),
    )(x3d, mean_slab)

    return out3d.reshape(n_img_pad, P)[:n_img].reshape(B, C, H, W)


if __name__ == "__main__":
    key = jax.random.PRNGKey(0)
    k_img, k_mean, k_big = jax.random.split(key, 3)

    # MNIST-like shapes (small batch): NCHW = [2, 1, 28, 28]
    B, C, H, W = 2, 1, 28, 28
    image = jax.random.uniform(k_img, (B, C, H, W), dtype=jnp.float32)
    # Deterministic synthetic "MNIST mean image" (stand-in for torch.load of
    # MNIST_MEAN_PATH). Shape [1, 28, 28], values in [0, 1).
    mnist_mean = jax.random.uniform(k_mean, (1, H, W), dtype=jnp.float32)
    ref = (image - mnist_mean) / MNIST_STD

    # 1) Small-input fast path (fused XLA elementwise).
    out_fast = jax.block_until_ready(normalize_mnist(image, mnist_mean))
    assert out_fast.shape == image.shape
    assert jnp.allclose(out_fast, ref, atol=1e-5, rtol=1e-5)

    # 2) Same small shape forced through the Pallas kernel: single-step grid,
    #    exercises slab padding (2 images padded to one 8-image slab).
    out_small = jax.block_until_ready(normalize_mnist(image, mnist_mean, force_pallas=True))
    assert out_small.shape == image.shape
    assert jnp.allclose(out_small, ref, atol=1e-5, rtol=1e-5)

    # 3) Batch large enough for the streaming path: multi-step grid, slab
    #    padding (1037 % 8 != 0) and a masked partial last block
    #    (130 slabs -> tiles of 64 + 64 + 2).
    B2 = 1037
    image2 = jax.random.uniform(k_big, (B2, 1, H, W), dtype=jnp.float32)
    out2 = jax.block_until_ready(normalize_mnist(image2, mnist_mean))
    ref2 = (image2 - mnist_mean) / MNIST_STD
    assert out2.shape == image2.shape
    assert jnp.allclose(out2, ref2, atol=1e-5, rtol=1e-5)

    print("KERNEL_OK")
</pallas_src>

<mosaic_0001>
module attributes {stable_mosaic.version = 11 : i64} {
  func.func @_normalize_kernel(%arg0: i32, %arg1: memref<1x49x128xf32, #tpu.memory_space<vmem>>, %arg2: memref<1x49x128xf32, #tpu.memory_space<vmem>>, %arg3: memref<1x49x128xf32, #tpu.memory_space<vmem>>) attributes {dimension_semantics = [#tpu.dimension_semantics<parallel>], iteration_bounds = array<i64: 1>, scalar_prefetch = 0 : i64, scratch_operands = 0 : i64, tpu.core_type = #tpu.core_type<tc>, window_params = [{transform_indices = @transform_0, window_bounds = array<i64: 1, 49, 128>}, {pipeline_mode = #tpu.pipeline_mode<synchronous>, transform_indices = @transform_1, window_bounds = array<i64: 1, 49, 128>}, {transform_indices = @transform_2, window_bounds = array<i64: 1, 49, 128>}]} {
    %c0 = arith.constant 0 : index
    %c0_0 = arith.constant 0 : index
    %c0_1 = arith.constant 0 : index
    %0 = vector.load %arg1[%c0, %c0_0, %c0_1] : memref<1x49x128xf32, #tpu.memory_space<vmem>>, vector<1x49x128xf32>
    %cst = arith.constant 3.24569941 : f32
    %1 = vector.broadcast %cst : f32 to vector<1x49x128xf32>
    %2 = arith.mulf %0, %1 : vector<1x49x128xf32>
    %c0_2 = arith.constant 0 : index
    %c0_3 = arith.constant 0 : index
    %c0_4 = arith.constant 0 : index
    %3 = vector.load %arg2[%c0_2, %c0_3, %c0_4] : memref<1x49x128xf32, #tpu.memory_space<vmem>>, vector<1x49x128xf32>
    %4 = arith.subf %2, %3 : vector<1x49x128xf32>
    %c0_5 = arith.constant 0 : index
    %c0_6 = arith.constant 0 : index
    %c0_7 = arith.constant 0 : index
    %5 = vector.load %arg3[%c0_5, %c0_6, %c0_7] : memref<1x49x128xf32, #tpu.memory_space<vmem>>, vector<1x49x128xf32>
    tpu.vector_store %arg3[%c0_5, %c0_6, %c0_7], %4 {strides = array<i32>} : memref<1x49x128xf32, #tpu.memory_space<vmem>>, vector<1x49x128xf32>,
    return
  }
  func.func @transform_0(%arg0: i32) -> (i32, i32, i32) {
    %c0_i32 = arith.constant 0 : i32
    %c0_i32_0 = arith.constant 0 : i32
    %c0_i32_1 = arith.constant 0 : i32
    return %arg0, %c0_i32, %c0_i32_0 : i32, i32, i32
  }
  func.func @transform_1(%arg0: i32) -> (i32, i32, i32) {
    %c0_i32 = arith.constant 0 : i32
    %c0_i32_0 = arith.constant 0 : i32
    %c0_i32_1 = arith.constant 0 : i32
    %c0_i32_2 = arith.constant 0 : i32
    return %c0_i32, %c0_i32_0, %c0_i32_1 : i32, i32, i32
  }
  func.func @transform_2(%arg0: i32) -> (i32, i32, i32) {
    %c0_i32 = arith.constant 0 : i32
    %c0_i32_0 = arith.constant 0 : i32
    %c0_i32_1 = arith.constant 0 : i32
    return %arg0, %c0_i32, %c0_i32_0 : i32, i32, i32
  }
}

</mosaic_0001>

<llo_original>
// kernel: tpu_custom_call.1
$region0: #{tpu_custom_call.1}
  #allocation0 [shape = 'u32[]', space=smem, size = 0x4, offset = 0x4, fixed_abs, tag = 'smem constant byte address 0x4 - core index']
  #allocation1 [shape = 'u32[144,128]{1,0:T(1,128)}', space=vmem, size = 0x12000, scoped, tag = 'internal scratch']
  %s0 = inlined_call_operand.vmem [shape: f32[1,49,128], index: 0, kind: input, shape index: {}]
  %s1 = inlined_call_operand.vmem [shape: f32[1,49,128], index: 1, kind: input, shape index: {}]
  %s2 = inlined_call_operand.vmem [shape: f32[1,49,128], index: 2, kind: output, shape index: {}]
  %s3 = sld [smem:[#allocation0]]
  $region18: #{tpu_custom_call.1} parent=0
    _
  %s5 = ssub.s32 1, %s3
  %s6 = scalar_select 0, %s5, %s3
  // Predicated region
  $region2: #{tpu_custom_call.1} parent=0 // pred_check
    _
  $region3: #{tpu_custom_call.1} parent=0 // pred_check_branch
    %8 = sbr.rel (0) target = $region5
  $region4: #{tpu_custom_call.1} parent=0 // pred_region
    _
  $region5: #{tpu_custom_call.1} parent=0 // pred_fallthru
    _
  // Predicated region
  $region6: #{tpu_custom_call.1} parent=0 // pred_check
    _
  $region7: #{tpu_custom_call.1} parent=0 // pred_check_branch
    %10 = sbr.rel (0) target = $region9
  $region8: #{tpu_custom_call.1} parent=0 // pred_region
    _
  $region9: #{tpu_custom_call.1} parent=0 // pred_fallthru
    _
  %v11 = vld [vmem:[%s0] sm:$0xff]
  %v12 = vld [vmem:[%s0 + $0x8] sm:$0xff]
  %v13 = vld [vmem:[%s0 + $0x10] sm:$0xff]
  %v14 = vld [vmem:[%s0 + $0x18] sm:$0xff]
  %v15 = vld [vmem:[%s0 + $0x20] sm:$0xff]
  %v16 = vld [vmem:[%s0 + $0x28] sm:$0xff]
  %v17 = vld [vmem:[%s0 + $0x30] sm:$0x1]
  %v18 = vmul.f32 %v11, 3.2456994
  %v19 = vmul.f32 %v12, 3.2456994
  %v20 = vmul.f32 %v13, 3.2456994
  %v21 = vmul.f32 %v14, 3.2456994
  %v22 = vmul.f32 %v15, 3.2456994
  %v23 = vmul.f32 %v16, 3.2456994
  %v24 = vmul.f32 %v17, 3.2456994
  %v25 = vld [vmem:[%s1] sm:$0xff]
  %v26 = vld [vmem:[%s1 + $0x8] sm:$0xff]
  %v27 = vld [vmem:[%s1 + $0x10] sm:$0xff]
  %v28 = vld [vmem:[%s1 + $0x18] sm:$0xff]
  %v29 = vld [vmem:[%s1 + $0x20] sm:$0xff]
  %v30 = vld [vmem:[%s1 + $0x28] sm:$0xff]
  %v31 = vld [vmem:[%s1 + $0x30] sm:$0x1]
  %v32 = vsub.f32 %v18, %v25
  %v33 = vsub.f32 %v19, %v26
  %v34 = vsub.f32 %v20, %v27
  %v35 = vsub.f32 %v21, %v28
  %v36 = vsub.f32 %v22, %v29
  %v37 = vsub.f32 %v23, %v30
  %v38 = vsub.f32 %v24, %v31
  %39 = vst [vmem:[%s2] sm:$0xff] %v32
  %40 = vst [vmem:[%s2 + $0x8] sm:$0xff] %v33
  %41 = vst [vmem:[%s2 + $0x10] sm:$0xff] %v34
  %42 = vst [vmem:[%s2 + $0x18] sm:$0xff] %v35
  %43 = vst [vmem:[%s2 + $0x20] sm:$0xff] %v36
  %44 = vst [vmem:[%s2 + $0x28] sm:$0xff] %v37
  %45 = vst [vmem:[%s2 + $0x30] sm:$0x1] %v38
  // Predicated region
  $region10: #{tpu_custom_call.1} parent=0 // pred_check
    _
  $region11: #{tpu_custom_call.1} parent=0 // pred_check_branch
    %47 = sbr.rel (0) target = $region13
  $region12: #{tpu_custom_call.1} parent=0 // pred_region
    _
  $region13: #{tpu_custom_call.1} parent=0 // pred_fallthru
    _
  // Predicated region
  $region14: #{tpu_custom_call.1} parent=0 // pred_check
    _
  $region15: #{tpu_custom_call.1} parent=0 // pred_check_branch
    %49 = sbr.rel (0) target = $region17
  $region16: #{tpu_custom_call.1} parent=0 // pred_region
    _
  $region17: #{tpu_custom_call.1} parent=0 // pred_fallthru
    _

</llo_original>
